<compile_context>
chip_gen: v6e
topology: v6e:2x2x1
jax: 0.10.0
libtpu: 0.0.40
codegen_flags: <defaults>
</compile_context>

<pallas_src>
import functools

import jax
import jax.numpy as jnp
import numpy as np
from jax.experimental import pallas as pl
from jax.experimental.pallas import tpu as pltpu


def _basic_block_kernel(x_ref, s1_ref, b1_ref, w1_ref, b2_ref, w2_ref, o_ref,
                        *, NB, H, WC, WF):
    """NB images per grid step, lane-dense (NB, H, W*C) layout.

    x_ref : (NB, H, W*C)  input slab, channels innermost on the lane axis
    s1/b1 : (1, W*C)      bn1 eval-mode scale / bias (tiled across w)
    w1    : (3, W*C, W*F) conv1 banded weights per ky (kx + bn2 scale folded), bf16
    b2    : (1, W*F)      bn2 eval-mode bias (tiled across w)
    w2    : (3, W*F, W*F) conv2 banded weights per ky, bf16
    o_ref : (NB, H, W*F)
    """
    M = NB * H
    x2 = x_ref[...].reshape(M, WC)                           # (M, WC) f32

    # --- bn1 (eval: precomputed scale/bias) + ReLU, f32 on the VPU ----------
    a = jnp.maximum(x2 * s1_ref[...] + b1_ref[...], 0.0)     # (M, WC)

    # Per-image vertical-boundary masks (row h must not read a neighbouring
    # image's rows through the stacked-batch layout).
    if NB > 1:
        row = jax.lax.broadcasted_iota(jnp.int32, (M, 1), 0)
        local = jax.lax.rem(row, H)
        not_top = local != 0          # a valid row above exists in this image
        not_bot = local != H - 1      # a valid row below exists in this image
    else:
        not_top = not_bot = None

    def conv3x3(act2, w_ref):
        # act2: (M, K) f32 activations; w_ref: (3, K, WF) bf16 banded weights.
        # ky taps = row-shifted copies built in registers (zero halo rows);
        # kx taps + channel contraction live inside the banded weight slabs.
        K = act2.shape[1]
        zrow = jnp.zeros((1, K), jnp.float32)
        up = jnp.concatenate([zrow, act2[:M - 1, :]], axis=0)   # row h reads h-1
        dn = jnp.concatenate([act2[1:, :], zrow], axis=0)       # row h reads h+1
        if NB > 1:
            up = jnp.where(not_top, up, 0.0)
            dn = jnp.where(not_bot, dn, 0.0)
        acc = jnp.dot(up.astype(jnp.bfloat16), w_ref[0],
                      preferred_element_type=jnp.float32)
        acc = acc + jnp.dot(act2.astype(jnp.bfloat16), w_ref[1],
                            preferred_element_type=jnp.float32)
        acc = acc + jnp.dot(dn.astype(jnp.bfloat16), w_ref[2],
                            preferred_element_type=jnp.float32)
        return acc                                              # (M, WF) f32

    # --- conv1: 3x3, stride 1, pad 1, no bias (bn2 scale pre-folded) --------
    out1 = conv3x3(a, w1_ref)

    # --- dropout(p=0.2): identity in eval mode -------------------------------
    # TODO(synk): training-mode dropout (pltpu.prng_random_bits mask) not emitted.

    # --- bn2 bias (scale folded into w1) + ReLU, f32 -------------------------
    b = jnp.maximum(out1 + b2_ref[...], 0.0)                   # (M, WF)

    # --- conv2: 3x3, stride 1, pad 1, no bias ---------------------------------
    out2 = conv3x3(b, w2_ref)

    # --- residual add (downsample=None -> identity; requires C == F) ---------
    o_ref[...] = (out2 + x2).reshape(NB, H, WF)


def _banded_conv3x3_weight(w_oihw, W, out_scale=None):
    """Torch (F, Cin, 3, 3) conv weight -> per-ky banded (3, W*Cin, W*F) matrix.

    Row index  = w_in*Cin + c
    Col index  = w_out*F + f
    Entry      = w[f, c, ky, kx] (* out_scale[f]) with kx = w_in - w_out + 1,
                 zero when |w_in - w_out| > 1 (implicit zero padding along w).
    """
    F_out, C_in = w_oihw.shape[0], w_oihw.shape[1]
    w = jnp.transpose(w_oihw, (2, 3, 1, 0)).astype(jnp.float32)  # (ky,kx,c,f)
    if out_scale is not None:
        w = w * out_scale.reshape(1, 1, 1, F_out).astype(jnp.float32)
    sel = np.zeros((3, W, W), np.float32)   # sel[kx, w_in, w_out]
    for kx in range(3):
        for wo in range(W):
            wi = wo + kx - 1
            if 0 <= wi < W:
                sel[kx, wi, wo] = 1.0
    big = jnp.einsum('xiw,yxcf->yicwf', jnp.asarray(sel), w)  # (3,W,Cin,W,F)
    return big.reshape(3, W * C_in, W * F_out)


def basic_block_pallas(x_nchw, params, *, nb_max=8):
    """x_nchw: (N, C, H, W) float32. Returns (N, C, H, W)."""
    N, C, H, W = x_nchw.shape
    F = params["w1"].shape[0]
    assert C == F, "downsample=None requires insize == filters"
    assert H % 8 == 0, "H must be sublane-aligned for free (NB,H)<->(NB*H) reshapes"

    WC, WF = W * C, W * F
    eps = 1e-5

    # Images per grid step: largest divisor of N up to nb_max (stacks the batch
    # into the matmul M dimension; total VMEM is far under budget at these shapes).
    NB = max(d for d in range(1, min(N, nb_max) + 1) if N % d == 0)

    # NCHW -> NHWC -> lane-dense slab (N, H, W*C)
    x = jnp.transpose(x_nchw, (0, 2, 3, 1)).astype(jnp.float32).reshape(N, H, WC)

    s1 = params["g1"] / jnp.sqrt(params["v1"] + eps)
    b1 = params["b1"] - params["m1"] * s1
    s2 = params["g2"] / jnp.sqrt(params["v2"] + eps)
    b2 = params["b2"] - params["m2"] * s2

    s1_t = jnp.tile(s1, W).reshape(1, WC).astype(jnp.float32)
    b1_t = jnp.tile(b1, W).reshape(1, WC).astype(jnp.float32)
    b2_t = jnp.tile(b2, W).reshape(1, WF).astype(jnp.float32)

    # bn2 scale folded into conv1's output channels; weights cast to bf16 for
    # full-rate MXU (accumulation stays f32 via preferred_element_type).
    w1b = _banded_conv3x3_weight(params["w1"], W, out_scale=s2).astype(jnp.bfloat16)
    w2b = _banded_conv3x3_weight(params["w2"], W).astype(jnp.bfloat16)

    kernel = functools.partial(_basic_block_kernel, NB=NB, H=H, WC=WC, WF=WF)

    out = pl.pallas_call(
        kernel,
        out_shape=jax.ShapeDtypeStruct((N, H, WF), jnp.float32),
        grid_spec=pltpu.PrefetchScalarGridSpec(
            num_scalar_prefetch=0,
            grid=(N // NB,),
            in_specs=[
                pl.BlockSpec((NB, H, WC), lambda n: (n, 0, 0)),
                pl.BlockSpec((1, WC), lambda n: (0, 0)),
                pl.BlockSpec((1, WC), lambda n: (0, 0)),
                pl.BlockSpec((3, WC, WF), lambda n: (0, 0, 0)),
                pl.BlockSpec((1, WF), lambda n: (0, 0)),
                pl.BlockSpec((3, WF, WF), lambda n: (0, 0, 0)),
            ],
            out_specs=pl.BlockSpec((NB, H, WF), lambda n: (n, 0, 0)),
        ),
        compiler_params=pltpu.CompilerParams(
            dimension_semantics=("parallel",)),
    )(x, s1_t, b1_t, w1b, b2_t, w2b)

    # (N, H, W*F) -> NHWC -> NCHW
    return jnp.transpose(out.reshape(N, H, W, F), (0, 3, 1, 2))


def basic_block_ref(x_nchw, params):
    """Pure-JAX f32 reference (eval-mode BN / dropout), NCHW in/out."""
    eps = 1e-5
    x = jnp.transpose(x_nchw, (0, 2, 3, 1))  # NHWC
    C = x.shape[-1]
    F = params["w1"].shape[0]

    def conv3x3(a, w_oihw):
        return jax.lax.conv_general_dilated(
            a, jnp.transpose(w_oihw, (2, 3, 1, 0)),  # -> HWIO
            window_strides=(1, 1), padding=((1, 1), (1, 1)),
            dimension_numbers=("NHWC", "HWIO", "NHWC"))

    s1 = params["g1"] / jnp.sqrt(params["v1"] + eps)
    b1 = params["b1"] - params["m1"] * s1
    s2 = params["g2"] / jnp.sqrt(params["v2"] + eps)
    b2 = params["b2"] - params["m2"] * s2

    a = jnp.maximum(x * s1.reshape(1, 1, 1, C) + b1.reshape(1, 1, 1, C), 0.0)
    c1 = conv3x3(a, params["w1"])
    b = jnp.maximum(c1 * s2.reshape(1, 1, 1, F) + b2.reshape(1, 1, 1, F), 0.0)
    c2 = conv3x3(b, params["w2"])
    out = c2 + x
    return jnp.transpose(out, (0, 3, 1, 2))


if __name__ == "__main__":
    # Small shapes consistent with the module: insize == filters (downsample=None)
    # W*C = 16*8 = 128 -> exactly one lane-dense vreg row; batch stacked -> M = 32.
    N, C, H, W = 2, 8, 16, 16
    F = C

    key = jax.random.PRNGKey(0)
    keys = jax.random.split(key, 9)
    x = jax.random.normal(keys[0], (N, C, H, W), dtype=jnp.float32)

    params = {
        # bn1
        "g1": jax.random.uniform(keys[1], (C,), minval=0.5, maxval=1.5),
        "b1": jax.random.normal(keys[2], (C,)) * 0.1,
        "m1": jax.random.normal(keys[3], (C,)) * 0.1,
        "v1": jax.random.uniform(keys[4], (C,), minval=0.5, maxval=1.5),
        # conv1
        "w1": jax.random.normal(keys[5], (F, C, 3, 3)) * 0.1,
        # bn2
        "g2": jax.random.uniform(keys[6], (F,), minval=0.5, maxval=1.5),
        "b2": jax.random.normal(keys[7], (F,)) * 0.1,
        "m2": jnp.zeros((F,), jnp.float32),
        "v2": jnp.ones((F,), jnp.float32),
        # conv2
        "w2": jax.random.normal(keys[8], (F, F, 3, 3)) * 0.1,
    }

    out = jax.block_until_ready(basic_block_pallas(x, params))
    ref = jax.block_until_ready(basic_block_ref(x, params))

    # bf16 MXU operands vs f32 reference -> loosened tolerance (still ~10x
    # below any structural-bug error scale).
    np.testing.assert_allclose(np.asarray(out), np.asarray(ref),
                               rtol=3e-2, atol=3e-2)
    print("KERNEL_OK")
</pallas_src>

<mosaic_0001>
module attributes {stable_mosaic.version = 11 : i64} {
  func.func @_basic_block_kernel(%arg0: i32, %arg1: memref<2x16x128xf32, #tpu.memory_space<vmem>>, %arg2: memref<1x128xf32, #tpu.memory_space<vmem>>, %arg3: memref<1x128xf32, #tpu.memory_space<vmem>>, %arg4: memref<3x128x128xbf16, #tpu.memory_space<vmem>>, %arg5: memref<1x128xf32, #tpu.memory_space<vmem>>, %arg6: memref<3x128x128xbf16, #tpu.memory_space<vmem>>, %arg7: memref<2x16x128xf32, #tpu.memory_space<vmem>>) attributes {dimension_semantics = [#tpu.dimension_semantics<parallel>], iteration_bounds = array<i64: 1>, scalar_prefetch = 0 : i64, scratch_operands = 0 : i64, tpu.core_type = #tpu.core_type<tc>, window_params = [{transform_indices = @transform_0, window_bounds = array<i64: 2, 16, 128>}, {pipeline_mode = #tpu.pipeline_mode<synchronous>, transform_indices = @transform_1, window_bounds = array<i64: 1, 128>}, {pipeline_mode = #tpu.pipeline_mode<synchronous>, transform_indices = @transform_2, window_bounds = array<i64: 1, 128>}, {pipeline_mode = #tpu.pipeline_mode<synchronous>, transform_indices = @transform_3, window_bounds = array<i64: 3, 128, 128>}, {pipeline_mode = #tpu.pipeline_mode<synchronous>, transform_indices = @transform_4, window_bounds = array<i64: 1, 128>}, {pipeline_mode = #tpu.pipeline_mode<synchronous>, transform_indices = @transform_5, window_bounds = array<i64: 3, 128, 128>}, {transform_indices = @transform_6, window_bounds = array<i64: 2, 16, 128>}]} {
    %c0 = arith.constant 0 : index
    %c0_0 = arith.constant 0 : index
    %c0_1 = arith.constant 0 : index
    %0 = vector.load %arg1[%c0, %c0_0, %c0_1] : memref<2x16x128xf32, #tpu.memory_space<vmem>>, vector<2x16x128xf32>
    %1 = vector.shape_cast %0 : vector<2x16x128xf32> to vector<32x128xf32>
    %c0_2 = arith.constant 0 : index
    %c0_3 = arith.constant 0 : index
    %2 = vector.load %arg2[%c0_2, %c0_3] : memref<1x128xf32, #tpu.memory_space<vmem>>, vector<1x128xf32>
    %3 = vector.broadcast %2 : vector<1x128xf32> to vector<32x128xf32>
    %4 = arith.mulf %1, %3 : vector<32x128xf32>
    %c0_4 = arith.constant 0 : index
    %c0_5 = arith.constant 0 : index
    %5 = vector.load %arg3[%c0_4, %c0_5] : memref<1x128xf32, #tpu.memory_space<vmem>>, vector<1x128xf32>
    %6 = vector.broadcast %5 : vector<1x128xf32> to vector<32x128xf32>
    %7 = arith.addf %4, %6 : vector<32x128xf32>
    %cst = arith.constant 0.000000e+00 : f32
    %8 = vector.broadcast %cst : f32 to vector<32x128xf32>
    %9 = arith.maximumf %7, %8 : vector<32x128xf32>
    %10 = tpu.iota {dimensions = array<i32: 0>} : vector<32x1xi32>
    %c16_i32 = arith.constant 16 : i32
    %11 = vector.broadcast %c16_i32 : i32 to vector<32x1xi32>
    %12 = arith.remsi %10, %11 : vector<32x1xi32>
    %c0_i32 = arith.constant 0 : i32
    %13 = vector.broadcast %c0_i32 : i32 to vector<32x1xi32>
    %14 = arith.cmpi ne, %12, %13 : vector<32x1xi32>
    %c15_i32 = arith.constant 15 : i32
    %15 = vector.broadcast %c15_i32 : i32 to vector<32x1xi32>
    %16 = arith.cmpi ne, %12, %15 : vector<32x1xi32>
    %cst_6 = arith.constant 0.000000e+00 : f32
    %17 = vector.broadcast %cst_6 : f32 to vector<1x128xf32>
    %18 = vector.extract_strided_slice %9 {offsets = [0, 0], sizes = [31, 128], strides = [1, 1]} : vector<32x128xf32> to vector<31x128xf32>
    %19 = tpu.concatenate %17, %18 in 0 : vector<1x128xf32>, vector<31x128xf32> -> vector<32x128xf32>
    %20 = vector.extract_strided_slice %9 {offsets = [1, 0], sizes = [31, 128], strides = [1, 1]} : vector<32x128xf32> to vector<31x128xf32>
    %21 = tpu.concatenate %20, %17 in 0 : vector<31x128xf32>, vector<1x128xf32> -> vector<32x128xf32>
    %cst_7 = arith.constant 0.000000e+00 : f32
    %22 = vector.shape_cast %14 : vector<32x1xi1> to vector<32x1xi1>
    %23 = vector.broadcast %22 : vector<32x1xi1> to vector<32x128xi1>
    %24 = vector.broadcast %cst_7 : f32 to vector<32x128xf32>
    %25 = arith.select %23, %19, %24 : vector<32x128xi1>, vector<32x128xf32>
    %cst_8 = arith.constant 0.000000e+00 : f32
    %26 = vector.shape_cast %16 : vector<32x1xi1> to vector<32x1xi1>
    %27 = vector.broadcast %26 : vector<32x1xi1> to vector<32x128xi1>
    %28 = vector.broadcast %cst_8 : f32 to vector<32x128xf32>
    %29 = arith.select %27, %21, %28 : vector<32x128xi1>, vector<32x128xf32>
    %30 = arith.truncf %25 : vector<32x128xf32> to vector<32x128xbf16>
    %c0_9 = arith.constant 0 : index
    %c0_10 = arith.constant 0 : index
    %c0_11 = arith.constant 0 : index
    %31 = vector.load %arg4[%c0_9, %c0_10, %c0_11] : memref<3x128x128xbf16, #tpu.memory_space<vmem>>, vector<1x128x128xbf16>
    %32 = vector.shape_cast %31 : vector<1x128x128xbf16> to vector<128x128xbf16>
    %cst_12 = arith.constant dense<0.000000e+00> : vector<32x128xf32>
    %33 = tpu.matmul %30, %32, %cst_12 {dimension_numbers = #tpu.dot_dimension_numbers<[1], [0], [0], [1], [0, 0, 1, 1], [], []>} : vector<32x128xbf16>, vector<128x128xbf16>, vector<32x128xf32> -> vector<32x128xf32>
    %34 = arith.truncf %9 : vector<32x128xf32> to vector<32x128xbf16>
    %c1 = arith.constant 1 : index
    %c0_13 = arith.constant 0 : index
    %c0_14 = arith.constant 0 : index
    %35 = vector.load %arg4[%c1, %c0_13, %c0_14] : memref<3x128x128xbf16, #tpu.memory_space<vmem>>, vector<1x128x128xbf16>
    %36 = vector.shape_cast %35 : vector<1x128x128xbf16> to vector<128x128xbf16>
    %cst_15 = arith.constant dense<0.000000e+00> : vector<32x128xf32>
    %37 = tpu.matmul %34, %36, %cst_15 {dimension_numbers = #tpu.dot_dimension_numbers<[1], [0], [0], [1], [0, 0, 1, 1], [], []>} : vector<32x128xbf16>, vector<128x128xbf16>, vector<32x128xf32> -> vector<32x128xf32>
    %38 = arith.addf %33, %37 : vector<32x128xf32>
    %39 = arith.truncf %29 : vector<32x128xf32> to vector<32x128xbf16>
    %c2 = arith.constant 2 : index
    %c0_16 = arith.constant 0 : index
    %c0_17 = arith.constant 0 : index
    %40 = vector.load %arg4[%c2, %c0_16, %c0_17] : memref<3x128x128xbf16, #tpu.memory_space<vmem>>, vector<1x128x128xbf16>
    %41 = vector.shape_cast %40 : vector<1x128x128xbf16> to vector<128x128xbf16>
    %cst_18 = arith.constant dense<0.000000e+00> : vector<32x128xf32>
    %42 = tpu.matmul %39, %41, %cst_18 {dimension_numbers = #tpu.dot_dimension_numbers<[1], [0], [0], [1], [0, 0, 1, 1], [], []>} : vector<32x128xbf16>, vector<128x128xbf16>, vector<32x128xf32> -> vector<32x128xf32>
    %43 = arith.addf %38, %42 : vector<32x128xf32>
    %c0_19 = arith.constant 0 : index
    %c0_20 = arith.constant 0 : index
    %44 = vector.load %arg5[%c0_19, %c0_20] : memref<1x128xf32, #tpu.memory_space<vmem>>, vector<1x128xf32>
    %45 = vector.broadcast %44 : vector<1x128xf32> to vector<32x128xf32>
    %46 = arith.addf %43, %45 : vector<32x128xf32>
    %cst_21 = arith.constant 0.000000e+00 : f32
    %47 = vector.broadcast %cst_21 : f32 to vector<32x128xf32>
    %48 = arith.maximumf %46, %47 : vector<32x128xf32>
    %cst_22 = arith.constant 0.000000e+00 : f32
    %49 = vector.broadcast %cst_22 : f32 to vector<1x128xf32>
    %50 = vector.extract_strided_slice %48 {offsets = [0, 0], sizes = [31, 128], strides = [1, 1]} : vector<32x128xf32> to vector<31x128xf32>
    %51 = tpu.concatenate %49, %50 in 0 : vector<1x128xf32>, vector<31x128xf32> -> vector<32x128xf32>
    %52 = vector.extract_strided_slice %48 {offsets = [1, 0], sizes = [31, 128], strides = [1, 1]} : vector<32x128xf32> to vector<31x128xf32>
    %53 = tpu.concatenate %52, %49 in 0 : vector<31x128xf32>, vector<1x128xf32> -> vector<32x128xf32>
    %cst_23 = arith.constant 0.000000e+00 : f32
    %54 = vector.shape_cast %14 : vector<32x1xi1> to vector<32x1xi1>
    %55 = vector.broadcast %54 : vector<32x1xi1> to vector<32x128xi1>
    %56 = vector.broadcast %cst_23 : f32 to vector<32x128xf32>
    %57 = arith.select %55, %51, %56 : vector<32x128xi1>, vector<32x128xf32>
    %cst_24 = arith.constant 0.000000e+00 : f32
    %58 = vector.shape_cast %16 : vector<32x1xi1> to vector<32x1xi1>
    %59 = vector.broadcast %58 : vector<32x1xi1> to vector<32x128xi1>
    %60 = vector.broadcast %cst_24 : f32 to vector<32x128xf32>
    %61 = arith.select %59, %53, %60 : vector<32x128xi1>, vector<32x128xf32>
    %62 = arith.truncf %57 : vector<32x128xf32> to vector<32x128xbf16>
    %c0_25 = arith.constant 0 : index
    %c0_26 = arith.constant 0 : index
    %c0_27 = arith.constant 0 : index
    %63 = vector.load %arg6[%c0_25, %c0_26, %c0_27] : memref<3x128x128xbf16, #tpu.memory_space<vmem>>, vector<1x128x128xbf16>
    %64 = vector.shape_cast %63 : vector<1x128x128xbf16> to vector<128x128xbf16>
    %cst_28 = arith.constant dense<0.000000e+00> : vector<32x128xf32>
    %65 = tpu.matmul %62, %64, %cst_28 {dimension_numbers = #tpu.dot_dimension_numbers<[1], [0], [0], [1], [0, 0, 1, 1], [], []>} : vector<32x128xbf16>, vector<128x128xbf16>, vector<32x128xf32> -> vector<32x128xf32>
    %66 = arith.truncf %48 : vector<32x128xf32> to vector<32x128xbf16>
    %c1_29 = arith.constant 1 : index
    %c0_30 = arith.constant 0 : index
    %c0_31 = arith.constant 0 : index
    %67 = vector.load %arg6[%c1_29, %c0_30, %c0_31] : memref<3x128x128xbf16, #tpu.memory_space<vmem>>, vector<1x128x128xbf16>
    %68 = vector.shape_cast %67 : vector<1x128x128xbf16> to vector<128x128xbf16>
    %cst_32 = arith.constant dense<0.000000e+00> : vector<32x128xf32>
    %69 = tpu.matmul %66, %68, %cst_32 {dimension_numbers = #tpu.dot_dimension_numbers<[1], [0], [0], [1], [0, 0, 1, 1], [], []>} : vector<32x128xbf16>, vector<128x128xbf16>, vector<32x128xf32> -> vector<32x128xf32>
    %70 = arith.addf %65, %69 : vector<32x128xf32>
    %71 = arith.truncf %61 : vector<32x128xf32> to vector<32x128xbf16>
    %c2_33 = arith.constant 2 : index
    %c0_34 = arith.constant 0 : index
    %c0_35 = arith.constant 0 : index
    %72 = vector.load %arg6[%c2_33, %c0_34, %c0_35] : memref<3x128x128xbf16, #tpu.memory_space<vmem>>, vector<1x128x128xbf16>
    %73 = vector.shape_cast %72 : vector<1x128x128xbf16> to vector<128x128xbf16>
    %cst_36 = arith.constant dense<0.000000e+00> : vector<32x128xf32>
    %74 = tpu.matmul %71, %73, %cst_36 {dimension_numbers = #tpu.dot_dimension_numbers<[1], [0], [0], [1], [0, 0, 1, 1], [], []>} : vector<32x128xbf16>, vector<128x128xbf16>, vector<32x128xf32> -> vector<32x128xf32>
    %75 = arith.addf %70, %74 : vector<32x128xf32>
    %76 = arith.addf %75, %1 : vector<32x128xf32>
    %77 = vector.shape_cast %76 : vector<32x128xf32> to vector<2x16x128xf32>
    %c0_37 = arith.constant 0 : index
    %c0_38 = arith.constant 0 : index
    %c0_39 = arith.constant 0 : index
    %78 = vector.load %arg7[%c0_37, %c0_38, %c0_39] : memref<2x16x128xf32, #tpu.memory_space<vmem>>, vector<2x16x128xf32>
    tpu.vector_store %arg7[%c0_37, %c0_38, %c0_39], %77 {strides = array<i32>} : memref<2x16x128xf32, #tpu.memory_space<vmem>>, vector<2x16x128xf32>,
    return
  }
  func.func @transform_0(%arg0: i32) -> (i32, i32, i32) {
    %c0_i32 = arith.constant 0 : i32
    %c0_i32_0 = arith.constant 0 : i32
    %c0_i32_1 = arith.constant 0 : i32
    return %arg0, %c0_i32, %c0_i32_0 : i32, i32, i32
  }
  func.func @transform_1(%arg0: i32) -> (i32, i32) {
    %c0_i32 = arith.constant 0 : i32
    %c0_i32_0 = arith.constant 0 : i32
    %c0_i32_1 = arith.constant 0 : i32
    return %c0_i32, %c0_i32_0 : i32, i32
  }
  func.func @transform_2(%arg0: i32) -> (i32, i32) {
    %c0_i32 = arith.constant 0 : i32
    %c0_i32_0 = arith.constant 0 : i32
    %c0_i32_1 = arith.constant 0 : i32
    return %c0_i32, %c0_i32_0 : i32, i32
  }
  func.func @transform_3(%arg0: i32) -> (i32, i32, i32) {
    %c0_i32 = arith.constant 0 : i32
    %c0_i32_0 = arith.constant 0 : i32
    %c0_i32_1 = arith.constant 0 : i32
    %c0_i32_2 = arith.constant 0 : i32
    return %c0_i32, %c0_i32_0, %c0_i32_1 : i32, i32, i32
  }
  func.func @transform_4(%arg0: i32) -> (i32, i32) {
    %c0_i32 = arith.constant 0 : i32
    %c0_i32_0 = arith.constant 0 : i32
    %c0_i32_1 = arith.constant 0 : i32
    return %c0_i32, %c0_i32_0 : i32, i32
  }
  func.func @transform_5(%arg0: i32) -> (i32, i32, i32) {
    %c0_i32 = arith.constant 0 : i32
    %c0_i32_0 = arith.constant 0 : i32
    %c0_i32_1 = arith.constant 0 : i32
    %c0_i32_2 = arith.constant 0 : i32
    return %c0_i32, %c0_i32_0, %c0_i32_1 : i32, i32, i32
  }
  func.func @transform_6(%arg0: i32) -> (i32, i32, i32) {
    %c0_i32 = arith.constant 0 : i32
    %c0_i32_0 = arith.constant 0 : i32
    %c0_i32_1 = arith.constant 0 : i32
    return %arg0, %c0_i32, %c0_i32_0 : i32, i32, i32
  }
}

</mosaic_0001>

<llo_original>
// kernel: tpu_custom_call.1
$region0: #{tpu_custom_call.1}
  #allocation0 [shape = 'u32[]', space=smem, size = 0x4, offset = 0x4, fixed_abs, tag = 'smem constant byte address 0x4 - core index']
  #allocation1 [shape = 'u32[144,128]{1,0:T(1,128)}', space=vmem, size = 0x12000, scoped, tag = 'internal scratch']
  %s0 = inlined_call_operand.hbm [shape: f32[2,16,128], index: 0, kind: input, shape index: {}]
  %s1 = inlined_call_operand.vmem [shape: f32[1,128], index: 1, kind: input, shape index: {}]
  %s2 = inlined_call_operand.vmem [shape: f32[1,128], index: 2, kind: input, shape index: {}]
  %s3 = inlined_call_operand.hbm [shape: bf16[3,128,128], index: 3, kind: input, shape index: {}]
  %s4 = inlined_call_operand.vmem [shape: f32[1,128], index: 4, kind: input, shape index: {}]
  %s5 = inlined_call_operand.hbm [shape: bf16[3,128,128], index: 5, kind: input, shape index: {}]
  %s6 = inlined_call_operand.hbm [shape: f32[2,16,128], index: 6, kind: output, shape index: {}]
  %s7 = sld [smem:[#allocation0]]
  $region46: #{tpu_custom_call.1} parent=0
    _
  %s9 = ssub.s32 1, %s7
  %s10 = scalar_select 0, %s9, %s7
  $region1: #{tpu_custom_call.1} parent=0
    #allocation2 [shape = 'u8[16384]{0}', space=vmem, size = 0x4000, scoped, tag = 'input window, operand 0, single buffered']
    #allocation3 [shape = 's32[1]{0}', space=sflag, size = 0x4, scoped, tag = 'scoped memory for tpu_custom_call.1']
    #allocation4 [shape = 's32[1]{0}', space=sflag, size = 0x4, scoped, tag = 'scoped memory for tpu_custom_call.1']
    #allocation5 [shape = 'u8[98304]{0}', space=vmem, size = 0x18000, scoped, tag = 'input window, operand 3, single buffered']
    #allocation6 [shape = 's32[1]{0}', space=sflag, size = 0x4, scoped, tag = 'scoped memory for tpu_custom_call.1']
    #allocation7 [shape = 'u8[98304]{0}', space=vmem, size = 0x18000, scoped, tag = 'input window, operand 5, single buffered']
    #allocation8 [shape = 'u8[16384]{0}', space=vmem, size = 0x4000, scoped, tag = 'output window, operand 0, single buffered']
    %11 = vsyncpa [#allocation3], 0
    %12 = vsyncpa [#allocation6], 0
    %13 = vsyncpa [#allocation4], 0
    // Predicated region
    $region2: #{tpu_custom_call.1} parent=1 // pred_check
      _
    $region3: #{tpu_custom_call.1} parent=1 // pred_check_branch
      %15 = sbr.rel (0) target = $region5
    $region4: #{tpu_custom_call.1} parent=1 // pred_region
      %s17 = ssub.s32 512, 512
      %18 = vsyncadd [#allocation3], %s17
      %s19 = sshll.u32 [#allocation2], 4
      %s20 = int_to_ptr.vmem [resolvable:$true] %s19
      %25 = dma.hbm_to_vmem [thread:$0]  %s0, 512, %s20, [#allocation3], 128, 128, 8
    $region5: #{tpu_custom_call.1} parent=1 // pred_fallthru
      _
    // Predicated region
    $region6: #{tpu_custom_call.1} parent=1 // pred_check
      _
    $region7: #{tpu_custom_call.1} parent=1 // pred_check_branch
      %27 = sbr.rel (0) target = $region9
    $region8: #{tpu_custom_call.1} parent=1 // pred_region
      _
    $region9: #{tpu_custom_call.1} parent=1 // pred_fallthru
      _
    // Predicated region
    $region10: #{tpu_custom_call.1} parent=1 // pred_check
      _
    $region11: #{tpu_custom_call.1} parent=1 // pred_check_branch
      %29 = sbr.rel (0) target = $region13
    $region12: #{tpu_custom_call.1} parent=1 // pred_region
      _
    $region13: #{tpu_custom_call.1} parent=1 // pred_fallthru
      _
    // Predicated region
    $region14: #{tpu_custom_call.1} parent=1 // pred_check
      _
    $region15: #{tpu_custom_call.1} parent=1 // pred_check_branch
      %31 = sbr.rel (0) target = $region17
    $region16: #{tpu_custom_call.1} parent=1 // pred_region
      %s33 = ssub.s32 3072, 3072
      %34 = vsyncadd [#allocation6], %s33
      %s35 = sshll.u32 [#allocation5], 4
      %s36 = int_to_ptr.vmem [resolvable:$true] %s35
      %41 = dma.hbm_to_vmem [thread:$0]  %s3, 3072, %s36, [#allocation6], 64, 64, 4
    $region17: #{tpu_custom_call.1} parent=1 // pred_fallthru
      _
    // Predicated region
    $region18: #{tpu_custom_call.1} parent=1 // pred_check
      _
    $region19: #{tpu_custom_call.1} parent=1 // pred_check_branch
      %43 = sbr.rel (0) target = $region21
    $region20: #{tpu_custom_call.1} parent=1 // pred_region
      _
    $region21: #{tpu_custom_call.1} parent=1 // pred_fallthru
      _
    // Predicated region
    $region22: #{tpu_custom_call.1} parent=1 // pred_check
      _
    $region23: #{tpu_custom_call.1} parent=1 // pred_check_branch
      %45 = sbr.rel (0) target = $region25
    $region24: #{tpu_custom_call.1} parent=1 // pred_region
      %s47 = ssub.s32 3072, 3072
      %48 = vsyncadd [#allocation6], %s47
      %s49 = sshll.u32 [#allocation7], 4
      %s50 = int_to_ptr.vmem [resolvable:$true] %s49
      %55 = dma.hbm_to_vmem [thread:$0]  %s5, 3072, %s50, [#allocation6], 64, 64, 4
    $region25: #{tpu_custom_call.1} parent=1 // pred_fallthru
      _
    // Predicated region
    $region26: #{tpu_custom_call.1} parent=1 // pred_check
      _
    $region27: #{tpu_custom_call.1} parent=1 // pred_check_branch
      %57 = sbr.rel (0) target = $region29
    $region28: #{tpu_custom_call.1} parent=1 // pred_region
      %58 = dma.done [#allocation3], 512
    $region29: #{tpu_custom_call.1} parent=1 // pred_fallthru
      _
    // Predicated region
    $region30: #{tpu_custom_call.1} parent=1 // pred_check
      _
    $region31: #{tpu_custom_call.1} parent=1 // pred_check_branch
      %60 = sbr.rel (0) target = $region33
    $region32: #{tpu_custom_call.1} parent=1 // pred_region
      %61 = dma.done [#allocation6], 3072
    $region33: #{tpu_custom_call.1} parent=1 // pred_fallthru
      _
    // Predicated region
    $region34: #{tpu_custom_call.1} parent=1 // pred_check
      _
    $region35: #{tpu_custom_call.1} parent=1 // pred_check_branch
      %63 = sbr.rel (0) target = $region37
    $region36: #{tpu_custom_call.1} parent=1 // pred_region
      %64 = dma.done [#allocation6], 3072
    $region37: #{tpu_custom_call.1} parent=1 // pred_fallthru
      _
    %v66 = vld [vmem:[#allocation2] sm:$0xff]
    %v67 = vld [vmem:[#allocation2 + $0x8] sm:$0xff]
    %v68 = vld [vmem:[#allocation2 + $0x10] sm:$0xff]
    %v69 = vld [vmem:[#allocation2 + $0x18] sm:$0xff]
    %v70 = vld [vmem:[%s1] sm:$0x1]
    %v72 = vlaneseq
    %v73 = vshrl.u32 %v72, 7
    %v74 = vsub.s32 0, %v73
    %v75 = vrot.slane %v70, %v74
    %v77 = vmul.f32 %v66, %v75
    %v78 = vmul.f32 %v67, %v75
    %v79 = vmul.f32 %v68, %v75
    %v80 = vmul.f32 %v69, %v75
    %v81 = vld [vmem:[%s2] sm:$0x1]
    %v83 = vlaneseq
    %v84 = vshrl.u32 %v83, 7
    %v85 = vsub.s32 0, %v84
    %v86 = vrot.slane %v81, %v85
    %v88 = vadd.f32 %v77, %v86
    %v89 = vadd.f32 %v78, %v86
    %v90 = vadd.f32 %v79, %v86
    %v91 = vadd.f32 %v80, %v86
    %v92 = vmax.f32 %v88, 0.0
    %v93 = vmax.f32 %v89, 0.0
    %v94 = vmax.f32 %v90, 0.0
    %v95 = vmax.f32 %v91, 0.0
    %v96 = vlaneseq
    %v97 = vshrl.u32 %v96, 7
    %v98 = vadd.s32 %v97, 8
    %v99 = vadd.s32 %v97, 16
    %v100 = vadd.s32 %v97, 24
    %vm101 = vcmp.lt.s32.totalorder %v97, 0
    %v102 = vsub.s32 0, %v97
    %v103 = vsel %vm101, %v102, %v97
    %v104 = vshrl.u32 %v103, 4
    %v105 = vand.u32 %v103, 15
    %v106 = vsub.s32 0, %v105
    %v107 = vsel %vm101, %v106, %v105
    %vm108 = vcmp.lt.s32.totalorder %v98, 0
    %v109 = vsub.s32 0, %v98
    %v110 = vsel %vm108, %v109, %v98
    %v111 = vshrl.u32 %v110, 4
    %v112 = vand.u32 %v110, 15
    %v113 = vsub.s32 0, %v112
    %v114 = vsel %vm108, %v113, %v112
    %vm115 = vcmp.lt.s32.totalorder %v99, 0
    %v116 = vsub.s32 0, %v99
    %v117 = vsel %vm115, %v116, %v99
    %v118 = vshrl.u32 %v117, 4
    %v119 = vand.u32 %v117, 15
    %v120 = vsub.s32 0, %v119
    %v121 = vsel %vm115, %v120, %v119
    %vm122 = vcmp.lt.s32.totalorder %v100, 0
    %v123 = vsub.s32 0, %v100
    %v124 = vsel %vm122, %v123, %v100
    %v125 = vshrl.u32 %v124, 4
    %v126 = vand.u32 %v124, 15
    %v127 = vsub.s32 0, %v126
    %v128 = vsel %vm122, %v127, %v126
    %vm129 = vcmp.ne.s32.totalorder %v107, 0
    %vm130 = vcmp.ne.s32.totalorder %v114, 0
    %vm131 = vcmp.ne.s32.totalorder %v121, 0
    %vm132 = vcmp.ne.s32.totalorder %v128, 0
    %vm133 = vcmp.ne.s32.totalorder %v107, 15
    %vm134 = vcmp.ne.s32.totalorder %v114, 15
    %vm135 = vcmp.ne.s32.totalorder %v121, 15
    %vm136 = vcmp.ne.s32.totalorder %v128, 15
    %vm141 = vcmask 1040384
    %v142 = vrot.slane %v92, 7
    %v143 = vrot.slane %v93, 7
    %v144 = vsel %vm141, %v142, %v143
    %v145 = vrot.slane %v94, 7
    %v146 = vsel %vm141, %v143, %v145
    %v147 = vrot.slane %v95, 7
    %v148 = vsel %vm141, %v145, %v147
    %v153 = vsel %vm141, 0.0, %v142
    %vm154 = vcmask 1046528
    %v155 = vrot.slane %v92, 1
    %v156 = vrot.slane %v93, 1
    %v157 = vsel %vm154, %v155, %v156
    %v158 = vrot.slane %v94, 1
    %v159 = vsel %vm154, %v156, %v158
    %v160 = vrot.slane %v95, 1
    %v161 = vsel %vm154, %v158, %v160
    %v166 = vsel %vm154, %v160, 0.0
    %v167 = vsel %vm129, 1, 0
    %v168 = vsel %vm130, 1, 0
    %v169 = vsel %vm131, 1, 0
    %v170 = vsel %vm132, 1, 0
    %vm171 = vcmp.eq.s32.totalorder %v167, 1
    %vm172 = vcmp.eq.s32.totalorder %v168, 1
    %vm173 = vcmp.eq.s32.totalorder %v169, 1
    %vm174 = vcmp.eq.s32.totalorder %v170, 1
    %v175 = vsel %vm171, %v153, 0.0
    %v176 = vsel %vm172, %v144, 0.0
    %v177 = vsel %vm173, %v146, 0.0
    %v178 = vsel %vm174, %v148, 0.0
    %v179 = vsel %vm133, 1, 0
    %v180 = vsel %vm134, 1, 0
    %v181 = vsel %vm135, 1, 0
    %v182 = vsel %vm136, 1, 0
    %vm183 = vcmp.eq.s32.totalorder %v179, 1
    %vm184 = vcmp.eq.s32.totalorder %v180, 1
    %vm185 = vcmp.eq.s32.totalorder %v181, 1
    %vm186 = vcmp.eq.s32.totalorder %v182, 1
    %v187 = vsel %vm183, %v157, 0.0
    %v188 = vsel %vm184, %v159, 0.0
    %v189 = vsel %vm185, %v161, 0.0
    %v190 = vsel %vm186, %v166, 0.0
    %v191 = vpack.c.bf16 %v176, %v175
    %v192 = vpack.c.bf16 %v178, %v177
    %v193 = vld [vmem:[#allocation5] sm:$0xf]
    %v194 = vld [vmem:[#allocation5 + $0x4] sm:$0xf]
    %v195 = vld [vmem:[#allocation5 + $0x8] sm:$0xf]
    %v196 = vld [vmem:[#allocation5 + $0xc] sm:$0xf]
    %v197 = vld [vmem:[#allocation5 + $0x10] sm:$0xf]
    %v198 = vld [vmem:[#allocation5 + $0x14] sm:$0xf]
    %v199 = vld [vmem:[#allocation5 + $0x18] sm:$0xf]
    %v200 = vld [vmem:[#allocation5 + $0x1c] sm:$0xf]
    %v201 = vld [vmem:[#allocation5 + $0x20] sm:$0xf]
    %v202 = vld [vmem:[#allocation5 + $0x24] sm:$0xf]
    %v203 = vld [vmem:[#allocation5 + $0x28] sm:$0xf]
    %v204 = vld [vmem:[#allocation5 + $0x2c] sm:$0xf]
    %v205 = vld [vmem:[#allocation5 + $0x30] sm:$0xf]
    %v206 = vld [vmem:[#allocation5 + $0x34] sm:$0xf]
    %v207 = vld [vmem:[#allocation5 + $0x38] sm:$0xf]
    %v208 = vld [vmem:[#allocation5 + $0x3c] sm:$0xf]
    %v209 = vpack.c.bf16 %v93, %v92
    %v210 = vpack.c.bf16 %v95, %v94
    %s211 = scalar_lea.vmem [#allocation5], 64
    %v212 = vld [vmem:[%s211] sm:$0xf]
    %v213 = vld [vmem:[%s211 + $0x4] sm:$0xf]
    %v214 = vld [vmem:[%s211 + $0x8] sm:$0xf]
    %v215 = vld [vmem:[%s211 + $0xc] sm:$0xf]
    %v216 = vld [vmem:[%s211 + $0x10] sm:$0xf]
    %v217 = vld [vmem:[%s211 + $0x14] sm:$0xf]
    %v218 = vld [vmem:[%s211 + $0x18] sm:$0xf]
    %v219 = vld [vmem:[%s211 + $0x1c] sm:$0xf]
    %v220 = vld [vmem:[%s211 + $0x20] sm:$0xf]
    %v221 = vld [vmem:[%s211 + $0x24] sm:$0xf]
    %v222 = vld [vmem:[%s211 + $0x28] sm:$0xf]
    %v223 = vld [vmem:[%s211 + $0x2c] sm:$0xf]
    %v224 = vld [vmem:[%s211 + $0x30] sm:$0xf]
    %v225 = vld [vmem:[%s211 + $0x34] sm:$0xf]
    %v226 = vld [vmem:[%s211 + $0x38] sm:$0xf]
    %v227 = vld [vmem:[%s211 + $0x3c] sm:$0xf]
    %v244 = vunpack.c.l.b16 %v212
    %v245 = vunpack.c.l.b16 %v213
    %v246 = vunpack.c.l.b16 %v214
    %v247 = vunpack.c.l.b16 %v215
    %v248 = vunpack.c.l.b16 %v216
    %v249 = vunpack.c.l.b16 %v217
    %v250 = vunpack.c.l.b16 %v218
    %v251 = vunpack.c.l.b16 %v219
    %v252 = vunpack.c.l.b16 %v220
    %v253 = vunpack.c.l.b16 %v221
    %v254 = vunpack.c.l.b16 %v222
    %v255 = vunpack.c.l.b16 %v223
    %v256 = vunpack.c.l.b16 %v224
    %v257 = vunpack.c.l.b16 %v225
    %v258 = vunpack.c.l.b16 %v226
    %v259 = vunpack.c.l.b16 %v227
    %v260 = vpack.c.b16 %v245, %v244
    %v261 = vpack.c.b16 %v247, %v246
    %v262 = vpack.c.b16 %v249, %v248
    %v263 = vpack.c.b16 %v251, %v250
    %v264 = vpack.c.b16 %v253, %v252
    %v265 = vpack.c.b16 %v255, %v254
    %v266 = vpack.c.b16 %v257, %v256
    %v267 = vpack.c.b16 %v259, %v258
    %276 = vmatprep.subr.bf16.mxu0 0
    %277 = vmatpush1.bf16.msra.mxu0 %v267
    %278 = vmatprep.subr.bf16.mxu0 0
    %279 = vmatpush1.bf16.msra.mxu0 %v266
    %280 = vmatprep.subr.bf16.mxu0 0
    %281 = vmatpush1.bf16.msra.mxu0 %v265
    %282 = vmatprep.subr.bf16.mxu0 0
    %283 = vmatpush1.bf16.msra.mxu0 %v264
    %284 = vmatprep.subr.bf16.mxu0 0
    %285 = vmatpush1.bf16.msra.mxu0 %v263
    %286 = vmatprep.subr.bf16.mxu0 0
    %287 = vmatpush1.bf16.msra.mxu0 %v262
    %288 = vmatprep.subr.bf16.mxu0 0
    %289 = vmatpush1.bf16.msra.mxu0 %v261
    %290 = vmatprep.subr.bf16.mxu0 0
    %291 = vmatpush1.bf16.msra.mxu0 %v260
    %292 = vmatprep.subr.bf16.mxu0 0
    %293 = vmatpush2.bf16.msra.mxu0 0
    %294 = vmatprep.subr.bf16.mxu0 0
    %295 = vmatpush2.bf16.msra.mxu0 0
    %296 = vmatprep.subr.bf16.mxu0 0
    %297 = vmatpush2.bf16.msra.mxu0 0
    %298 = vmatprep.subr.bf16.mxu0 0
    %299 = vmatpush2.bf16.msra.mxu0 0
    %300 = vmatprep.subr.bf16.mxu0 0
    %301 = vmatpush2.bf16.msra.mxu0 0
    %302 = vmatprep.subr.bf16.mxu0 0
    %303 = vmatpush2.bf16.msra.mxu0 0
    %304 = vmatprep.subr.bf16.mxu0 0
    %305 = vmatpush2.bf16.msra.mxu0 0
    %306 = vmatprep.subr.bf16.mxu0 0
    %307 = vmatpush2.bf16.msra.mxu0 0
    %308 = vmatprep.mubr.bf16.mxu0 0
    %309 = vmatmul.mubr.bf16.gmra.mxu0 %v209
    %v310 = vpop.f32.mrf.mxu0
    %v311 = vadd.f32 0.0, %v310
    %v312 = vpop.f32.mrf.mxu0
    %v313 = vpop.f32.mrf.mxu0
    %v314 = vadd.f32 0.0, %v313
    %v315 = vpop.f32.mrf.mxu0
    %316 = vmatprep.mubr.bf16.mxu0 0
    %317 = vmatmul.mubr.bf16.gmra.mxu0 %v210
    %v318 = vpop.f32.mrf.mxu0
    %v319 = vadd.f32 0.0, %v318
    %v320 = vpop.f32.mrf.mxu0
    %v321 = vpop.f32.mrf.mxu0
    %v322 = vadd.f32 0.0, %v321
    %v323 = vpop.f32.mrf.mxu0
    %324 = vdwg.mxu0
    %v341 = vunpack.c.l.b16 %v193
    %v342 = vunpack.c.l.b16 %v194
    %v343 = vunpack.c.l.b16 %v195
    %v344 = vunpack.c.l.b16 %v196
    %v345 = vunpack.c.l.b16 %v197
    %v346 = vunpack.c.l.b16 %v198
    %v347 = vunpack.c.l.b16 %v199
    %v348 = vunpack.c.l.b16 %v200
    %v349 = vunpack.c.l.b16 %v201
    %v350 = vunpack.c.l.b16 %v202
    %v351 = vunpack.c.l.b16 %v203
    %v352 = vunpack.c.l.b16 %v204
    %v353 = vunpack.c.l.b16 %v205
    %v354 = vunpack.c.l.b16 %v206
    %v355 = vunpack.c.l.b16 %v207
    %v356 = vunpack.c.l.b16 %v208
    %v357 = vpack.c.b16 %v342, %v341
    %v358 = vpack.c.b16 %v344, %v343
    %v359 = vpack.c.b16 %v346, %v345
    %v360 = vpack.c.b16 %v348, %v347
    %v361 = vpack.c.b16 %v350, %v349
    %v362 = vpack.c.b16 %v352, %v351
    %v363 = vpack.c.b16 %v354, %v353
    %v364 = vpack.c.b16 %v356, %v355
    %373 = vmatprep.subr.bf16.mxu0 0
    %374 = vmatpush1.bf16.msra.mxu0 %v364
    %375 = vmatprep.subr.bf16.mxu0 0
    %376 = vmatpush1.bf16.msra.mxu0 %v363
    %377 = vmatprep.subr.bf16.mxu0 0
    %378 = vmatpush1.bf16.msra.mxu0 %v362
    %379 = vmatprep.subr.bf16.mxu0 0
    %380 = vmatpush1.bf16.msra.mxu0 %v361
    %381 = vmatprep.subr.bf16.mxu0 0
    %382 = vmatpush1.bf16.msra.mxu0 %v360
    %383 = vmatprep.subr.bf16.mxu0 0
    %384 = vmatpush1.bf16.msra.mxu0 %v359
    %385 = vmatprep.subr.bf16.mxu0 0
    %386 = vmatpush1.bf16.msra.mxu0 %v358
    %387 = vmatprep.subr.bf16.mxu0 0
    %388 = vmatpush1.bf16.msra.mxu0 %v357
    %389 = vmatprep.subr.bf16.mxu0 0
    %390 = vmatpush2.bf16.msra.mxu0 0
    %391 = vmatprep.subr.bf16.mxu0 0
    %392 = vmatpush2.bf16.msra.mxu0 0
    %393 = vmatprep.subr.bf16.mxu0 0
    %394 = vmatpush2.bf16.msra.mxu0 0
    %395 = vmatprep.subr.bf16.mxu0 0
    %396 = vmatpush2.bf16.msra.mxu0 0
    %397 = vmatprep.subr.bf16.mxu0 0
    %398 = vmatpush2.bf16.msra.mxu0 0
    %399 = vmatprep.subr.bf16.mxu0 0
    %400 = vmatpush2.bf16.msra.mxu0 0
    %401 = vmatprep.subr.bf16.mxu0 0
    %402 = vmatpush2.bf16.msra.mxu0 0
    %403 = vmatprep.subr.bf16.mxu0 0
    %404 = vmatpush2.bf16.msra.mxu0 0
    %405 = vmatprep.mubr.bf16.mxu0 0
    %406 = vmatmul.mubr.bf16.gmra.mxu0 %v191
    %v407 = vpop.f32.mrf.mxu0
    %v408 = vadd.f32 %v311, %v407
    %v409 = vpop.f32.mrf.mxu0
    %v410 = vpop.f32.mrf.mxu0
    %v411 = vadd.f32 %v314, %v410
    %v412 = vpop.f32.mrf.mxu0
    %413 = vmatprep.mubr.bf16.mxu0 0
    %414 = vmatmul.mubr.bf16.gmra.mxu0 %v192
    %v415 = vpop.f32.mrf.mxu0
    %v416 = vadd.f32 %v319, %v415
    %v417 = vpop.f32.mrf.mxu0
    %v418 = vpop.f32.mrf.mxu0
    %v419 = vadd.f32 %v322, %v418
    %v420 = vpop.f32.mrf.mxu0
    %421 = vdwg.mxu0
    %v422 = vpack.c.bf16 %v188, %v187
    %v423 = vpack.c.bf16 %v190, %v189
    %s424 = scalar_lea.vmem [#allocation5], 128
    %v425 = vld [vmem:[%s424] sm:$0xf]
    %v426 = vld [vmem:[%s424 + $0x4] sm:$0xf]
    %v427 = vld [vmem:[%s424 + $0x8] sm:$0xf]
    %v428 = vld [vmem:[%s424 + $0xc] sm:$0xf]
    %v429 = vld [vmem:[%s424 + $0x10] sm:$0xf]
    %v430 = vld [vmem:[%s424 + $0x14] sm:$0xf]
    %v431 = vld [vmem:[%s424 + $0x18] sm:$0xf]
    %v432 = vld [vmem:[%s424 + $0x1c] sm:$0xf]
    %v433 = vld [vmem:[%s424 + $0x20] sm:$0xf]
    %v434 = vld [vmem:[%s424 + $0x24] sm:$0xf]
    %v435 = vld [vmem:[%s424 + $0x28] sm:$0xf]
    %v436 = vld [vmem:[%s424 + $0x2c] sm:$0xf]
    %v437 = vld [vmem:[%s424 + $0x30] sm:$0xf]
    %v438 = vld [vmem:[%s424 + $0x34] sm:$0xf]
    %v439 = vld [vmem:[%s424 + $0x38] sm:$0xf]
    %v440 = vld [vmem:[%s424 + $0x3c] sm:$0xf]
    %v457 = vunpack.c.l.b16 %v425
    %v458 = vunpack.c.l.b16 %v426
    %v459 = vunpack.c.l.b16 %v427
    %v460 = vunpack.c.l.b16 %v428
    %v461 = vunpack.c.l.b16 %v429
    %v462 = vunpack.c.l.b16 %v430
    %v463 = vunpack.c.l.b16 %v431
    %v464 = vunpack.c.l.b16 %v432
    %v465 = vunpack.c.l.b16 %v433
    %v466 = vunpack.c.l.b16 %v434
    %v467 = vunpack.c.l.b16 %v435
    %v468 = vunpack.c.l.b16 %v436
    %v469 = vunpack.c.l.b16 %v437
    %v470 = vunpack.c.l.b16 %v438
    %v471 = vunpack.c.l.b16 %v439
    %v472 = vunpack.c.l.b16 %v440
    %v473 = vpack.c.b16 %v458, %v457
    %v474 = vpack.c.b16 %v460, %v459
    %v475 = vpack.c.b16 %v462, %v461
    %v476 = vpack.c.b16 %v464, %v463
    %v477 = vpack.c.b16 %v466, %v465
    %v478 = vpack.c.b16 %v468, %v467
    %v479 = vpack.c.b16 %v470, %v469
    %v480 = vpack.c.b16 %v472, %v471
    %489 = vmatprep.subr.bf16.mxu0 0
    %490 = vmatpush1.bf16.msra.mxu0 %v480
    %491 = vmatprep.subr.bf16.mxu0 0
    %492 = vmatpush1.bf16.msra.mxu0 %v479
    %493 = vmatprep.subr.bf16.mxu0 0
    %494 = vmatpush1.bf16.msra.mxu0 %v478
    %495 = vmatprep.subr.bf16.mxu0 0
    %496 = vmatpush1.bf16.msra.mxu0 %v477
    %497 = vmatprep.subr.bf16.mxu0 0
    %498 = vmatpush1.bf16.msra.mxu0 %v476
    %499 = vmatprep.subr.bf16.mxu0 0
    %500 = vmatpush1.bf16.msra.mxu0 %v475
    %501 = vmatprep.subr.bf16.mxu0 0
    %502 = vmatpush1.bf16.msra.mxu0 %v474
    %503 = vmatprep.subr.bf16.mxu0 0
    %504 = vmatpush1.bf16.msra.mxu0 %v473
    %505 = vmatprep.subr.bf16.mxu0 0
    %506 = vmatpush2.bf16.msra.mxu0 0
    %507 = vmatprep.subr.bf16.mxu0 0
    %508 = vmatpush2.bf16.msra.mxu0 0
    %509 = vmatprep.subr.bf16.mxu0 0
    %510 = vmatpush2.bf16.msra.mxu0 0
    %511 = vmatprep.subr.bf16.mxu0 0
    %512 = vmatpush2.bf16.msra.mxu0 0
    %513 = vmatprep.subr.bf16.mxu0 0
    %514 = vmatpush2.bf16.msra.mxu0 0
    %515 = vmatprep.subr.bf16.mxu0 0
    %516 = vmatpush2.bf16.msra.mxu0 0
    %517 = vmatprep.subr.bf16.mxu0 0
    %518 = vmatpush2.bf16.msra.mxu0 0
    %519 = vmatprep.subr.bf16.mxu0 0
    %520 = vmatpush2.bf16.msra.mxu0 0
    %521 = vmatprep.mubr.bf16.mxu0 0
    %522 = vmatmul.mubr.bf16.gmra.mxu0 %v422
    %v523 = vpop.f32.mrf.mxu0
    %v524 = vadd.f32 0.0, %v523
    %v525 = vpop.f32.mrf.mxu0
    %v526 = vpop.f32.mrf.mxu0
    %v527 = vadd.f32 0.0, %v526
    %v528 = vpop.f32.mrf.mxu0
    %529 = vmatprep.mubr.bf16.mxu0 0
    %530 = vmatmul.mubr.bf16.gmra.mxu0 %v423
    %v531 = vpop.f32.mrf.mxu0
    %v532 = vadd.f32 0.0, %v531
    %v533 = vpop.f32.mrf.mxu0
    %v534 = vpop.f32.mrf.mxu0
    %v535 = vadd.f32 0.0, %v534
    %v536 = vpop.f32.mrf.mxu0
    %537 = vdwg.mxu0
    %v538 = vadd.f32 %v408, %v524
    %v539 = vadd.f32 %v411, %v527
    %v540 = vadd.f32 %v416, %v532
    %v541 = vadd.f32 %v419, %v535
    %v542 = vld [vmem:[%s4] sm:$0x1]
    %v544 = vlaneseq
    %v545 = vshrl.u32 %v544, 7
    %v546 = vsub.s32 0, %v545
    %v547 = vrot.slane %v542, %v546
    %v549 = vadd.f32 %v538, %v547
    %v550 = vadd.f32 %v539, %v547
    %v551 = vadd.f32 %v540, %v547
    %v552 = vadd.f32 %v541, %v547
    %v553 = vmax.f32 %v549, 0.0
    %v554 = vmax.f32 %v550, 0.0
    %v555 = vmax.f32 %v551, 0.0
    %v556 = vmax.f32 %v552, 0.0
    %v561 = vrot.slane %v553, 7
    %v562 = vrot.slane %v554, 7
    %v563 = vsel %vm141, %v561, %v562
    %v564 = vrot.slane %v555, 7
    %v565 = vsel %vm141, %v562, %v564
    %v566 = vrot.slane %v556, 7
    %v567 = vsel %vm141, %v564, %v566
    %v572 = vsel %vm141, 0.0, %v561
    %v573 = vrot.slane %v553, 1
    %v574 = vrot.slane %v554, 1
    %v575 = vsel %vm154, %v573, %v574
    %v576 = vrot.slane %v555, 1
    %v577 = vsel %vm154, %v574, %v576
    %v578 = vrot.slane %v556, 1
    %v579 = vsel %vm154, %v576, %v578
    %v584 = vsel %vm154, %v578, 0.0
    %v585 = vsel %vm171, %v572, 0.0
    %v586 = vsel %vm172, %v563, 0.0
    %v587 = vsel %vm173, %v565, 0.0
    %v588 = vsel %vm174, %v567, 0.0
    %v589 = vsel %vm183, %v575, 0.0
    %v590 = vsel %vm184, %v577, 0.0
    %v591 = vsel %vm185, %v579, 0.0
    %v592 = vsel %vm186, %v584, 0.0
    %v593 = vpack.c.bf16 %v586, %v585
    %v594 = vpack.c.bf16 %v588, %v587
    %v595 = vld [vmem:[#allocation7] sm:$0xf]
    %v596 = vld [vmem:[#allocation7 + $0x4] sm:$0xf]
    %v597 = vld [vmem:[#allocation7 + $0x8] sm:$0xf]
    %v598 = vld [vmem:[#allocation7 + $0xc] sm:$0xf]
    %v599 = vld [vmem:[#allocation7 + $0x10] sm:$0xf]
    %v600 = vld [vmem:[#allocation7 + $0x14] sm:$0xf]
    %v601 = vld [vmem:[#allocation7 + $0x18] sm:$0xf]
    %v602 = vld [vmem:[#allocation7 + $0x1c] sm:$0xf]
    %v603 = vld [vmem:[#allocation7 + $0x20] sm:$0xf]
    %v604 = vld [vmem:[#allocation7 + $0x24] sm:$0xf]
    %v605 = vld [vmem:[#allocation7 + $0x28] sm:$0xf]
    %v606 = vld [vmem:[#allocation7 + $0x2c] sm:$0xf]
    %v607 = vld [vmem:[#allocation7 + $0x30] sm:$0xf]
    %v608 = vld [vmem:[#allocation7 + $0x34] sm:$0xf]
    %v609 = vld [vmem:[#allocation7 + $0x38] sm:$0xf]
    %v610 = vld [vmem:[#allocation7 + $0x3c] sm:$0xf]
    %v611 = vpack.c.bf16 %v554, %v553
    %v612 = vpack.c.bf16 %v556, %v555
    %s613 = scalar_lea.vmem [#allocation7], 64
    %v614 = vld [vmem:[%s613] sm:$0xf]
    %v615 = vld [vmem:[%s613 + $0x4] sm:$0xf]
    %v616 = vld [vmem:[%s613 + $0x8] sm:$0xf]
    %v617 = vld [vmem:[%s613 + $0xc] sm:$0xf]
    %v618 = vld [vmem:[%s613 + $0x10] sm:$0xf]
    %v619 = vld [vmem:[%s613 + $0x14] sm:$0xf]
    %v620 = vld [vmem:[%s613 + $0x18] sm:$0xf]
    %v621 = vld [vmem:[%s613 + $0x1c] sm:$0xf]
    %v622 = vld [vmem:[%s613 + $0x20] sm:$0xf]
    %v623 = vld [vmem:[%s613 + $0x24] sm:$0xf]
    %v624 = vld [vmem:[%s613 + $0x28] sm:$0xf]
    %v625 = vld [vmem:[%s613 + $0x2c] sm:$0xf]
    %v626 = vld [vmem:[%s613 + $0x30] sm:$0xf]
    %v627 = vld [vmem:[%s613 + $0x34] sm:$0xf]
    %v628 = vld [vmem:[%s613 + $0x38] sm:$0xf]
    %v629 = vld [vmem:[%s613 + $0x3c] sm:$0xf]
    %v646 = vunpack.c.l.b16 %v614
    %v647 = vunpack.c.l.b16 %v615
    %v648 = vunpack.c.l.b16 %v616
    %v649 = vunpack.c.l.b16 %v617
    %v650 = vunpack.c.l.b16 %v618
    %v651 = vunpack.c.l.b16 %v619
    %v652 = vunpack.c.l.b16 %v620
    %v653 = vunpack.c.l.b16 %v621
    %v654 = vunpack.c.l.b16 %v622
    %v655 = vunpack.c.l.b16 %v623
    %v656 = vunpack.c.l.b16 %v624
    %v657 = vunpack.c.l.b16 %v625
    %v658 = vunpack.c.l.b16 %v626
    %v659 = vunpack.c.l.b16 %v627
    %v660 = vunpack.c.l.b16 %v628
    %v661 = vunpack.c.l.b16 %v629
    %v662 = vpack.c.b16 %v647, %v646
    %v663 = vpack.c.b16 %v649, %v648
    %v664 = vpack.c.b16 %v651, %v650
    %v665 = vpack.c.b16 %v653, %v652
    %v666 = vpack.c.b16 %v655, %v654
    %v667 = vpack.c.b16 %v657, %v656
    %v668 = vpack.c.b16 %v659, %v658
    %v669 = vpack.c.b16 %v661, %v660
    %678 = vmatprep.subr.bf16.mxu0 0
    %679 = vmatpush1.bf16.msra.mxu0 %v669
    %680 = vmatprep.subr.bf16.mxu0 0
    %681 = vmatpush1.bf16.msra.mxu0 %v668
    %682 = vmatprep.subr.bf16.mxu0 0
    %683 = vmatpush1.bf16.msra.mxu0 %v667
    %684 = vmatprep.subr.bf16.mxu0 0
    %685 = vmatpush1.bf16.msra.mxu0 %v666
    %686 = vmatprep.subr.bf16.mxu0 0
    %687 = vmatpush1.bf16.msra.mxu0 %v665
    %688 = vmatprep.subr.bf16.mxu0 0
    %689 = vmatpush1.bf16.msra.mxu0 %v664
    %690 = vmatprep.subr.bf16.mxu0 0
    %691 = vmatpush1.bf16.msra.mxu0 %v663
    %692 = vmatprep.subr.bf16.mxu0 0
    %693 = vmatpush1.bf16.msra.mxu0 %v662
    %694 = vmatprep.subr.bf16.mxu0 0
    %695 = vmatpush2.bf16.msra.mxu0 0
    %696 = vmatprep.subr.bf16.mxu0 0
    %697 = vmatpush2.bf16.msra.mxu0 0
    %698 = vmatprep.subr.bf16.mxu0 0
    %699 = vmatpush2.bf16.msra.mxu0 0
    %700 = vmatprep.subr.bf16.mxu0 0
    %701 = vmatpush2.bf16.msra.mxu0 0
    %702 = vmatprep.subr.bf16.mxu0 0
    %703 = vmatpush2.bf16.msra.mxu0 0
    %704 = vmatprep.subr.bf16.mxu0 0
    %705 = vmatpush2.bf16.msra.mxu0 0
    %706 = vmatprep.subr.bf16.mxu0 0
    %707 = vmatpush2.bf16.msra.mxu0 0
    %708 = vmatprep.subr.bf16.mxu0 0
    %709 = vmatpush2.bf16.msra.mxu0 0
    %710 = vmatprep.mubr.bf16.mxu0 0
    %711 = vmatmul.mubr.bf16.gmra.mxu0 %v611
    %v712 = vpop.f32.mrf.mxu0
    %v713 = vadd.f32 0.0, %v712
    %v714 = vpop.f32.mrf.mxu0
    %v715 = vpop.f32.mrf.mxu0
    %v716 = vadd.f32 0.0, %v715
    %v717 = vpop.f32.mrf.mxu0
    %718 = vmatprep.mubr.bf16.mxu0 0
    %719 = vmatmul.mubr.bf16.gmra.mxu0 %v612
    %v720 = vpop.f32.mrf.mxu0
    %v721 = vadd.f32 0.0, %v720
    %v722 = vpop.f32.mrf.mxu0
    %v723 = vpop.f32.mrf.mxu0
    %v724 = vadd.f32 0.0, %v723
    %v725 = vpop.f32.mrf.mxu0
    %726 = vdwg.mxu0
    %v743 = vunpack.c.l.b16 %v595
    %v744 = vunpack.c.l.b16 %v596
    %v745 = vunpack.c.l.b16 %v597
    %v746 = vunpack.c.l.b16 %v598
    %v747 = vunpack.c.l.b16 %v599
    %v748 = vunpack.c.l.b16 %v600
    %v749 = vunpack.c.l.b16 %v601
    %v750 = vunpack.c.l.b16 %v602
    %v751 = vunpack.c.l.b16 %v603
    %v752 = vunpack.c.l.b16 %v604
    %v753 = vunpack.c.l.b16 %v605
    %v754 = vunpack.c.l.b16 %v606
    %v755 = vunpack.c.l.b16 %v607
    %v756 = vunpack.c.l.b16 %v608
    %v757 = vunpack.c.l.b16 %v609
    %v758 = vunpack.c.l.b16 %v610
    %v759 = vpack.c.b16 %v744, %v743
    %v760 = vpack.c.b16 %v746, %v745
    %v761 = vpack.c.b16 %v748, %v747
    %v762 = vpack.c.b16 %v750, %v749
    %v763 = vpack.c.b16 %v752, %v751
    %v764 = vpack.c.b16 %v754, %v753
    %v765 = vpack.c.b16 %v756, %v755
    %v766 = vpack.c.b16 %v758, %v757
    %775 = vmatprep.subr.bf16.mxu0 0
    %776 = vmatpush1.bf16.msra.mxu0 %v766
    %777 = vmatprep.subr.bf16.mxu0 0
    %778 = vmatpush1.bf16.msra.mxu0 %v765
    %779 = vmatprep.subr.bf16.mxu0 0
    %780 = vmatpush1.bf16.msra.mxu0 %v764
    %781 = vmatprep.subr.bf16.mxu0 0
    %782 = vmatpush1.bf16.msra.mxu0 %v763
    %783 = vmatprep.subr.bf16.mxu0 0
    %784 = vmatpush1.bf16.msra.mxu0 %v762
    %785 = vmatprep.subr.bf16.mxu0 0
    %786 = vmatpush1.bf16.msra.mxu0 %v761
    %787 = vmatprep.subr.bf16.mxu0 0
    %788 = vmatpush1.bf16.msra.mxu0 %v760
    %789 = vmatprep.subr.bf16.mxu0 0
    %790 = vmatpush1.bf16.msra.mxu0 %v759
    %791 = vmatprep.subr.bf16.mxu0 0
    %792 = vmatpush2.bf16.msra.mxu0 0
    %793 = vmatprep.subr.bf16.mxu0 0
    %794 = vmatpush2.bf16.msra.mxu0 0
    %795 = vmatprep.subr.bf16.mxu0 0
    %796 = vmatpush2.bf16.msra.mxu0 0
    %797 = vmatprep.subr.bf16.mxu0 0
    %798 = vmatpush2.bf16.msra.mxu0 0
    %799 = vmatprep.subr.bf16.mxu0 0
    %800 = vmatpush2.bf16.msra.mxu0 0
    %801 = vmatprep.subr.bf16.mxu0 0
    %802 = vmatpush2.bf16.msra.mxu0 0
    %803 = vmatprep.subr.bf16.mxu0 0
    %804 = vmatpush2.bf16.msra.mxu0 0
    %805 = vmatprep.subr.bf16.mxu0 0
    %806 = vmatpush2.bf16.msra.mxu0 0
    %807 = vmatprep.mubr.bf16.mxu0 0
    %808 = vmatmul.mubr.bf16.gmra.mxu0 %v593
    %v809 = vpop.f32.mrf.mxu0
    %v810 = vadd.f32 %v713, %v809
    %v811 = vpop.f32.mrf.mxu0
    %v812 = vpop.f32.mrf.mxu0
    %v813 = vadd.f32 %v716, %v812
    %v814 = vpop.f32.mrf.mxu0
    %815 = vmatprep.mubr.bf16.mxu0 0
    %816 = vmatmul.mubr.bf16.gmra.mxu0 %v594
    %v817 = vpop.f32.mrf.mxu0
    %v818 = vadd.f32 %v721, %v817
    %v819 = vpop.f32.mrf.mxu0
    %v820 = vpop.f32.mrf.mxu0
    %v821 = vadd.f32 %v724, %v820
    %v822 = vpop.f32.mrf.mxu0
    %823 = vdwg.mxu0
    %v824 = vpack.c.bf16 %v590, %v589
    %v825 = vpack.c.bf16 %v592, %v591
    %s826 = scalar_lea.vmem [#allocation7], 128
    %v827 = vld [vmem:[%s826] sm:$0xf]
    %v828 = vld [vmem:[%s826 + $0x4] sm:$0xf]
    %v829 = vld [vmem:[%s826 + $0x8] sm:$0xf]
    %v830 = vld [vmem:[%s826 + $0xc] sm:$0xf]
    %v831 = vld [vmem:[%s826 + $0x10] sm:$0xf]
    %v832 = vld [vmem:[%s826 + $0x14] sm:$0xf]
    %v833 = vld [vmem:[%s826 + $0x18] sm:$0xf]
    %v834 = vld [vmem:[%s826 + $0x1c] sm:$0xf]
    %v835 = vld [vmem:[%s826 + $0x20] sm:$0xf]
    %v836 = vld [vmem:[%s826 + $0x24] sm:$0xf]
    %v837 = vld [vmem:[%s826 + $0x28] sm:$0xf]
    %v838 = vld [vmem:[%s826 + $0x2c] sm:$0xf]
    %v839 = vld [vmem:[%s826 + $0x30] sm:$0xf]
    %v840 = vld [vmem:[%s826 + $0x34] sm:$0xf]
    %v841 = vld [vmem:[%s826 + $0x38] sm:$0xf]
    %v842 = vld [vmem:[%s826 + $0x3c] sm:$0xf]
    %v859 = vunpack.c.l.b16 %v827
    %v860 = vunpack.c.l.b16 %v828
    %v861 = vunpack.c.l.b16 %v829
    %v862 = vunpack.c.l.b16 %v830
    %v863 = vunpack.c.l.b16 %v831
    %v864 = vunpack.c.l.b16 %v832
    %v865 = vunpack.c.l.b16 %v833
    %v866 = vunpack.c.l.b16 %v834
    %v867 = vunpack.c.l.b16 %v835
    %v868 = vunpack.c.l.b16 %v836
    %v869 = vunpack.c.l.b16 %v837
    %v870 = vunpack.c.l.b16 %v838
    %v871 = vunpack.c.l.b16 %v839
    %v872 = vunpack.c.l.b16 %v840
    %v873 = vunpack.c.l.b16 %v841
    %v874 = vunpack.c.l.b16 %v842
    %v875 = vpack.c.b16 %v860, %v859
    %v876 = vpack.c.b16 %v862, %v861
    %v877 = vpack.c.b16 %v864, %v863
    %v878 = vpack.c.b16 %v866, %v865
    %v879 = vpack.c.b16 %v868, %v867
    %v880 = vpack.c.b16 %v870, %v869
    %v881 = vpack.c.b16 %v872, %v871
    %v882 = vpack.c.b16 %v874, %v873
    %891 = vmatprep.subr.bf16.mxu0 0
    %892 = vmatpush1.bf16.msra.mxu0 %v882
    %893 = vmatprep.subr.bf16.mxu0 0
    %894 = vmatpush1.bf16.msra.mxu0 %v881
    %895 = vmatprep.subr.bf16.mxu0 0
    %896 = vmatpush1.bf16.msra.mxu0 %v880
    %897 = vmatprep.subr.bf16.mxu0 0
    %898 = vmatpush1.bf16.msra.mxu0 %v879
    %899 = vmatprep.subr.bf16.mxu0 0
    %900 = vmatpush1.bf16.msra.mxu0 %v878
    %901 = vmatprep.subr.bf16.mxu0 0
    %902 = vmatpush1.bf16.msra.mxu0 %v877
    %903 = vmatprep.subr.bf16.mxu0 0
    %904 = vmatpush1.bf16.msra.mxu0 %v876
    %905 = vmatprep.subr.bf16.mxu0 0
    %906 = vmatpush1.bf16.msra.mxu0 %v875
    %907 = vmatprep.subr.bf16.mxu0 0
    %908 = vmatpush2.bf16.msra.mxu0 0
    %909 = vmatprep.subr.bf16.mxu0 0
    %910 = vmatpush2.bf16.msra.mxu0 0
    %911 = vmatprep.subr.bf16.mxu0 0
    %912 = vmatpush2.bf16.msra.mxu0 0
    %913 = vmatprep.subr.bf16.mxu0 0
    %914 = vmatpush2.bf16.msra.mxu0 0
    %915 = vmatprep.subr.bf16.mxu0 0
    %916 = vmatpush2.bf16.msra.mxu0 0
    %917 = vmatprep.subr.bf16.mxu0 0
    %918 = vmatpush2.bf16.msra.mxu0 0
    %919 = vmatprep.subr.bf16.mxu0 0
    %920 = vmatpush2.bf16.msra.mxu0 0
    %921 = vmatprep.subr.bf16.mxu0 0
    %922 = vmatpush2.bf16.msra.mxu0 0
    %923 = vmatprep.mubr.bf16.mxu0 0
    %924 = vmatmul.mubr.bf16.gmra.mxu0 %v824
    %v925 = vpop.f32.mrf.mxu0
    %v926 = vadd.f32 0.0, %v925
    %v927 = vpop.f32.mrf.mxu0
    %v928 = vpop.f32.mrf.mxu0
    %v929 = vadd.f32 0.0, %v928
    %v930 = vpop.f32.mrf.mxu0
    %931 = vmatprep.mubr.bf16.mxu0 0
    %932 = vmatmul.mubr.bf16.gmra.mxu0 %v825
    %v933 = vpop.f32.mrf.mxu0
    %v934 = vadd.f32 0.0, %v933
    %v935 = vpop.f32.mrf.mxu0
    %v936 = vpop.f32.mrf.mxu0
    %v937 = vadd.f32 0.0, %v936
    %v938 = vpop.f32.mrf.mxu0
    %939 = vdwg.mxu0
    %v940 = vadd.f32 %v810, %v926
    %v941 = vadd.f32 %v813, %v929
    %v942 = vadd.f32 %v818, %v934
    %v943 = vadd.f32 %v821, %v937
    %v944 = vadd.f32 %v940, %v66
    %v945 = vadd.f32 %v941, %v67
    %v946 = vadd.f32 %v942, %v68
    %v947 = vadd.f32 %v943, %v69
    %948 = vst [vmem:[#allocation8] sm:$0xff] %v944
    %949 = vst [vmem:[#allocation8 + $0x8] sm:$0xff] %v945
    %950 = vst [vmem:[#allocation8 + $0x10] sm:$0xff] %v946
    %951 = vst [vmem:[#allocation8 + $0x18] sm:$0xff] %v947
    // Predicated region
    $region38: #{tpu_custom_call.1} parent=1 // pred_check
      _
    $region39: #{tpu_custom_call.1} parent=1 // pred_check_branch
      %953 = sbr.rel (0) target = $region41
    $region40: #{tpu_custom_call.1} parent=1 // pred_region
      %s955 = ssub.s32 512, 512
      %956 = vsyncadd [#allocation4], %s955
      %s957 = sshll.u32 [#allocation8], 4
      %s958 = int_to_ptr.vmem [resolvable:$true] %s957
      %963 = dma.vmem_to_hbm [thread:$0]  %s958, 512, %s6, [#allocation4], 128, 128, 8
    $region41: #{tpu_custom_call.1} parent=1 // pred_fallthru
      _
    // Predicated region
    $region42: #{tpu_custom_call.1} parent=1 // pred_check
      _
    $region43: #{tpu_custom_call.1} parent=1 // pred_check_branch
      %965 = sbr.rel (0) target = $region45
    $region44: #{tpu_custom_call.1} parent=1 // pred_region
      %966 = dma.done [#allocation4], 512
    $region45: #{tpu_custom_call.1} parent=1 // pred_fallthru
      _
    %967 = vsyncpa [#allocation3], 1
    %968 = vsyncpa [#allocation6], 1
    %969 = vsyncpa [#allocation4], 1

</llo_original>
